<compile_context>
chip_gen: v6e
topology: v6e:2x2x1
jax: 0.10.0
libtpu: 0.0.40
codegen_flags: <defaults>
</compile_context>

<pallas_src>
import functools

import jax
import jax.numpy as jnp
from jax import lax
from jax.experimental import pallas as pl
from jax.experimental.pallas import tpu as pltpu

_NEG_BIG = -1e30  # bias for padded tag columns -> exp() underflows to 0


def _round_up(x, m):
    return (x + m - 1) // m * m


def _vmem_capacity_bytes():
    try:
        info = pltpu.get_tpu_info()
        return int(getattr(info, "vmem_capacity_bytes", 64 * 2**20))
    except Exception:
        return 64 * 2**20  # conservative (v7x) fallback


def _working_set_bytes(tile_n, H, T_pad):
    f32b = 4
    resident = (H * T_pad + T_pad) * f32b                 # weight + bias (per buffer)
    per_tile = tile_n * (H + T_pad + 2) * f32b            # x, prob, labels, nll (per buffer)
    interm = 4 * tile_n * T_pad * f32b                    # logits / exp / temporaries
    return 2 * resident + 2 * per_tile + interm           # default double-buffering


def _choose_tile_n(N, H, T_pad, vmem_cap):
    # Big tiles for bandwidth efficiency, but at least 2 grid steps (v7x megacore)
    # when N allows it; always a multiple of the f32 sublane (8).
    tile_n = min(512, max(8, _round_up((N + 1) // 2, 8)))
    while tile_n > 8 and _working_set_bytes(tile_n, H, T_pad) > int(vmem_cap * 0.85):
        tile_n = max(8, _round_up(tile_n // 2, 8))
    return tile_n


def prepare_fc_params(weight, bias):
    """One-time parameter prep (do this at init, not per forward call).

    weight: (T, H) float32 (PyTorch nn.Linear layout: out = x @ W.T + b)
    bias:   (T,)   float32
    Returns:
      w_p: (H, T_pad) float32  -- transposed, T padded to a multiple of 128
      b_p: (1, T_pad) float32  -- padded columns get a huge negative bias
    """
    T, H = weight.shape
    T_pad = _round_up(T, 128)
    w_p = jnp.pad(weight.astype(jnp.float32).T, ((0, 0), (0, T_pad - T)))
    b_p = jnp.pad(bias.astype(jnp.float32), (0, T_pad - T),
                  constant_values=_NEG_BIG).reshape(1, T_pad)
    return w_p, b_p


def _linear_softmax(x, w, b):
    # x: (tile_n, H), w: (H, T_pad), b: (1, T_pad); canonical (M,K)x(K,N) MXU matmul.
    logits = jnp.dot(x, w, preferred_element_type=jnp.float32) + b   # (tile_n, T_pad)
    m = jnp.max(logits, axis=-1, keepdims=True)                      # (tile_n, 1)
    e = jnp.exp(logits - m)                                          # (tile_n, T_pad)
    s = jnp.sum(e, axis=-1, keepdims=True)                           # (tile_n, 1)
    # approx=False keeps the 1e-5 tolerance; flip to True if relaxed.
    prob = e * pl.reciprocal(s, approx=False)
    return logits, prob, m, s


def _fc_prob_kernel(x_ref, w_ref, b_ref, prob_ref):
    _, prob, _, _ = _linear_softmax(x_ref[...], w_ref[...], b_ref[...])
    prob_ref[...] = prob


def _fc_prob_loss_kernel(n_valid, tile_n, x_ref, w_ref, b_ref, labels_ref,
                         prob_ref, nll_ref):
    logits, prob, m, s = _linear_softmax(x_ref[...], w_ref[...], b_ref[...])
    prob_ref[...] = prob

    # Per-row cross entropy: logsumexp(logits) - logits[label]
    logsumexp = m + jnp.log(s)                                   # (tile_n, 1)
    n, t = logits.shape
    col_ids = lax.broadcasted_iota(jnp.int32, (n, t), 1)         # (tile_n, T_pad)
    onehot = col_ids == labels_ref[...]                          # broadcast (tile_n, 1)
    label_logit = jnp.sum(jnp.where(onehot, logits, 0.0), axis=-1, keepdims=True)
    nll = logsumexp - label_logit                                # (tile_n, 1)

    # Zero padded rows in-kernel so the wrapper's loss is just sum(nll) / N.
    row_ids = pl.program_id(0) * tile_n + lax.broadcasted_iota(jnp.int32, (n, 1), 0)
    nll_ref[...] = jnp.where(row_ids < n_valid, nll, 0.0)


def fc_forward(hiddens, w_p, b_p, num_tags, labels=None):
    """JAX/Pallas equivalent of FC.forward.

    hiddens: (..., H) float32
    w_p/b_p: outputs of prepare_fc_params (prepared once at init time)
    labels:  (...,)   int or None
    Returns prob (..., num_tags); and (prob, loss) when labels is given.
    """
    orig_shape = hiddens.shape
    H = orig_shape[-1]
    T = num_tags
    H_w, T_pad = w_p.shape
    assert H_w == H and T_pad % 128 == 0 and T <= T_pad

    x = hiddens.reshape(-1, H).astype(jnp.float32)
    N = x.shape[0]

    vmem_cap = _vmem_capacity_bytes()
    tile_n = _choose_tile_n(N, H, T_pad, vmem_cap)
    N_pad = _round_up(N, tile_n)
    num_tiles = N_pad // tile_n

    x_p = x if N_pad == N else jnp.pad(x, ((0, N_pad - N), (0, 0)))

    needed = _working_set_bytes(tile_n, H, T_pad)
    vmem_limit = int(min(int(vmem_cap * 0.85), max(needed + (4 << 20), 32 << 20)))

    cparams = pltpu.CompilerParams(
        dimension_semantics=("parallel",),   # row tiles are independent (v7x: 2 TCs)
        vmem_limit_bytes=vmem_limit,
    )

    # Block last dims: H == full array dim (no (8,128) violation, no HBM padding);
    # T_pad is a multiple of 128 so the prob store is lane-dense unmasked vst.
    x_spec = pl.BlockSpec((tile_n, H), lambda i: (i, 0))
    w_spec = pl.BlockSpec((H, T_pad), lambda i: (0, 0))    # VMEM-resident
    b_spec = pl.BlockSpec((1, T_pad), lambda i: (0, 0))    # VMEM-resident
    prob_spec = pl.BlockSpec((tile_n, T_pad), lambda i: (i, 0))

    def _finish_prob(prob_p):
        if N_pad == N and T_pad == T:
            return prob_p.reshape(*orig_shape[:-1], T)     # no copy needed
        return prob_p[:N, :T].reshape(*orig_shape[:-1], T)

    if labels is None:
        prob_p = pl.pallas_call(
            _fc_prob_kernel,
            out_shape=jax.ShapeDtypeStruct((N_pad, T_pad), jnp.float32),
            grid=(num_tiles,),
            in_specs=[x_spec, w_spec, b_spec],
            out_specs=prob_spec,
            compiler_params=cparams,
        )(x_p, w_p, b_p)
        return _finish_prob(prob_p)

    lbl = labels.reshape(-1).astype(jnp.int32)
    lbl_p = (lbl if N_pad == N else jnp.pad(lbl, (0, N_pad - N))).reshape(N_pad, 1)
    lbl_spec = pl.BlockSpec((tile_n, 1), lambda i: (i, 0))
    nll_spec = pl.BlockSpec((tile_n, 1), lambda i: (i, 0))

    kernel = functools.partial(_fc_prob_loss_kernel, N, tile_n)
    prob_p, nll_p = pl.pallas_call(
        kernel,
        out_shape=(
            jax.ShapeDtypeStruct((N_pad, T_pad), jnp.float32),
            jax.ShapeDtypeStruct((N_pad, 1), jnp.float32),
        ),
        grid=(num_tiles,),
        in_specs=[x_spec, w_spec, b_spec, lbl_spec],
        out_specs=(prob_spec, nll_spec),
        compiler_params=cparams,
    )(x_p, w_p, b_p, lbl_p)

    prob = _finish_prob(prob_p)
    # nn.CrossEntropyLoss default: mean over the N valid rows (padded rows are 0).
    loss = jnp.sum(nll_p) / N
    return prob, loss


if __name__ == "__main__":
    key = jax.random.PRNGKey(0)
    k_x, k_w, k_b, k_l = jax.random.split(key, 4)

    batch, seq, hidden, num_tags = 2, 8, 32, 16

    # Deterministic parameter init (synthetic, like nn.Linear's uniform init)
    bound = 1.0 / (hidden ** 0.5)
    weight = jax.random.uniform(k_w, (num_tags, hidden), jnp.float32, -bound, bound)
    bias = jax.random.uniform(k_b, (num_tags,), jnp.float32, -bound, bound)

    hiddens = jax.random.normal(k_x, (batch, seq, hidden), jnp.float32)
    labels = jax.random.randint(k_l, (batch, seq), 0, num_tags, jnp.int32)

    # One-time parameter prep (cast + pad + transpose), hoisted out of forward.
    w_p, b_p = prepare_fc_params(weight, bias)

    # Path with labels: (prob, loss)
    prob, loss = fc_forward(hiddens, w_p, b_p, num_tags, labels)
    prob = jax.block_until_ready(prob)
    loss = jax.block_until_ready(loss)

    # Path without labels: prob only (no CE work inside the kernel)
    prob_only = jax.block_until_ready(fc_forward(hiddens, w_p, b_p, num_tags))

    # Sanity checks vs. pure-JAX reference
    logits_ref = hiddens @ weight.T + bias
    prob_ref = jax.nn.softmax(logits_ref, axis=-1)
    lse = jax.scipy.special.logsumexp(logits_ref.reshape(-1, num_tags), axis=-1)
    picked = jnp.take_along_axis(
        logits_ref.reshape(-1, num_tags), labels.reshape(-1, 1), axis=-1
    )[:, 0]
    loss_ref = jnp.mean(lse - picked)

    assert prob.shape == (batch, seq, num_tags)
    assert jnp.allclose(prob, prob_ref, atol=1e-5)
    assert jnp.allclose(prob_only, prob_ref, atol=1e-5)
    assert jnp.allclose(loss, loss_ref, atol=1e-5)

    print("KERNEL_OK")
</pallas_src>

<mosaic_0001>
module attributes {stable_mosaic.version = 11 : i64} {
  func.func @_fc_prob_loss_kernel(%arg0: i32, %arg1: memref<8x32xf32, #tpu.memory_space<vmem>>, %arg2: memref<32x128xf32, #tpu.memory_space<vmem>>, %arg3: memref<1x128xf32, #tpu.memory_space<vmem>>, %arg4: memref<8x1xi32, #tpu.memory_space<vmem>>, %arg5: memref<8x128xf32, #tpu.memory_space<vmem>>, %arg6: memref<8x1xf32, #tpu.memory_space<vmem>>) attributes {dimension_semantics = [#tpu.dimension_semantics<parallel>], iteration_bounds = array<i64: 2>, scalar_prefetch = 0 : i64, scratch_operands = 0 : i64, tpu.core_type = #tpu.core_type<tc>, window_params = [{transform_indices = @transform_0, window_bounds = array<i64: 8, 32>}, {pipeline_mode = #tpu.pipeline_mode<synchronous>, transform_indices = @transform_1, window_bounds = array<i64: 32, 128>}, {pipeline_mode = #tpu.pipeline_mode<synchronous>, transform_indices = @transform_2, window_bounds = array<i64: 1, 128>}, {transform_indices = @transform_3, window_bounds = array<i64: 8, 1>}, {transform_indices = @transform_4, window_bounds = array<i64: 8, 128>}, {transform_indices = @transform_5, window_bounds = array<i64: 8, 1>}]} {
    %c0 = arith.constant 0 : index
    %c0_0 = arith.constant 0 : index
    %0 = vector.load %arg1[%c0, %c0_0] : memref<8x32xf32, #tpu.memory_space<vmem>>, vector<8x32xf32>
    %c0_1 = arith.constant 0 : index
    %c0_2 = arith.constant 0 : index
    %1 = vector.load %arg2[%c0_1, %c0_2] : memref<32x128xf32, #tpu.memory_space<vmem>>, vector<32x128xf32>
    %c0_3 = arith.constant 0 : index
    %c0_4 = arith.constant 0 : index
    %2 = vector.load %arg3[%c0_3, %c0_4] : memref<1x128xf32, #tpu.memory_space<vmem>>, vector<1x128xf32>
    %cst = arith.constant dense<0.000000e+00> : vector<8x128xf32>
    %3 = tpu.matmul %0, %1, %cst {dimension_numbers = #tpu.dot_dimension_numbers<[1], [0], [0], [1], [0, 0, 1, 1], [], []>} : vector<8x32xf32>, vector<32x128xf32>, vector<8x128xf32> -> vector<8x128xf32>
    %4 = vector.broadcast %2 : vector<1x128xf32> to vector<8x128xf32>
    %5 = arith.addf %3, %4 : vector<8x128xf32>
    %cst_5 = arith.constant dense<0xFF800000> : vector<8xf32>
    %6 = vector.multi_reduction <maximumf>, %5, %cst_5 [1] : vector<8x128xf32> to vector<8xf32>
    %7 = vector.shape_cast %6 : vector<8xf32> to vector<8x1xf32>
    %8 = vector.broadcast %7 : vector<8x1xf32> to vector<8x128xf32>
    %9 = arith.subf %5, %8 : vector<8x128xf32>
    %10 = math.exp %9 : vector<8x128xf32>
    %cst_6 = arith.constant dense<0.000000e+00> : vector<8xf32>
    %11 = vector.multi_reduction <add>, %10, %cst_6 [1] : vector<8x128xf32> to vector<8xf32>
    %12 = vector.shape_cast %11 : vector<8xf32> to vector<8x1xf32>
    %13 = tpu.reciprocal %12 : vector<8x1xf32> -> vector<8x1xf32>
    %14 = vector.broadcast %13 : vector<8x1xf32> to vector<8x128xf32>
    %15 = arith.mulf %10, %14 : vector<8x128xf32>
    %c0_7 = arith.constant 0 : index
    %c0_8 = arith.constant 0 : index
    %16 = vector.load %arg5[%c0_7, %c0_8] : memref<8x128xf32, #tpu.memory_space<vmem>>, vector<8x128xf32>
    tpu.vector_store %arg5[%c0_7, %c0_8], %15 {strides = array<i32>} : memref<8x128xf32, #tpu.memory_space<vmem>>, vector<8x128xf32>,
    %17 = math.log %12 : vector<8x1xf32>
    %18 = arith.addf %7, %17 : vector<8x1xf32>
    %19 = tpu.iota {dimensions = array<i32: 1>} : vector<8x128xi32>
    %c0_9 = arith.constant 0 : index
    %c0_10 = arith.constant 0 : index
    %20 = vector.load %arg4[%c0_9, %c0_10] : memref<8x1xi32, #tpu.memory_space<vmem>>, vector<8x1xi32>
    %21 = vector.broadcast %20 : vector<8x1xi32> to vector<8x128xi32>
    %22 = arith.cmpi eq, %19, %21 : vector<8x128xi32>
    %cst_11 = arith.constant 0.000000e+00 : f32
    %23 = vector.broadcast %cst_11 : f32 to vector<8x128xf32>
    %24 = arith.select %22, %5, %23 : vector<8x128xi1>, vector<8x128xf32>
    %cst_12 = arith.constant dense<0.000000e+00> : vector<8xf32>
    %25 = vector.multi_reduction <add>, %24, %cst_12 [1] : vector<8x128xf32> to vector<8xf32>
    %26 = vector.shape_cast %25 : vector<8xf32> to vector<8x1xf32>
    %27 = arith.subf %18, %26 : vector<8x1xf32>
    %c8_i32 = arith.constant 8 : i32
    %28 = arith.muli %arg0, %c8_i32 : i32
    %29 = tpu.iota {dimensions = array<i32: 0>} : vector<8x1xi32>
    %30 = vector.broadcast %28 : i32 to vector<8x1xi32>
    %31 = arith.addi %30, %29 : vector<8x1xi32>
    %c16_i32 = arith.constant 16 : i32
    %32 = vector.broadcast %c16_i32 : i32 to vector<8x1xi32>
    %33 = arith.cmpi slt, %31, %32 : vector<8x1xi32>
    %cst_13 = arith.constant 0.000000e+00 : f32
    %34 = vector.broadcast %cst_13 : f32 to vector<8x1xf32>
    %35 = arith.select %33, %27, %34 : vector<8x1xi1>, vector<8x1xf32>
    %c0_14 = arith.constant 0 : index
    %c0_15 = arith.constant 0 : index
    %36 = vector.load %arg6[%c0_14, %c0_15] : memref<8x1xf32, #tpu.memory_space<vmem>>, vector<8x1xf32>
    tpu.vector_store %arg6[%c0_14, %c0_15], %35 {strides = array<i32>} : memref<8x1xf32, #tpu.memory_space<vmem>>, vector<8x1xf32>,
    return
  }
  func.func @transform_0(%arg0: i32) -> (i32, i32) {
    %c0_i32 = arith.constant 0 : i32
    %c0_i32_0 = arith.constant 0 : i32
    return %arg0, %c0_i32 : i32, i32
  }
  func.func @transform_1(%arg0: i32) -> (i32, i32) {
    %c0_i32 = arith.constant 0 : i32
    %c0_i32_0 = arith.constant 0 : i32
    %c0_i32_1 = arith.constant 0 : i32
    return %c0_i32, %c0_i32_0 : i32, i32
  }
  func.func @transform_2(%arg0: i32) -> (i32, i32) {
    %c0_i32 = arith.constant 0 : i32
    %c0_i32_0 = arith.constant 0 : i32
    %c0_i32_1 = arith.constant 0 : i32
    return %c0_i32, %c0_i32_0 : i32, i32
  }
  func.func @transform_3(%arg0: i32) -> (i32, i32) {
    %c0_i32 = arith.constant 0 : i32
    %c0_i32_0 = arith.constant 0 : i32
    return %arg0, %c0_i32 : i32, i32
  }
  func.func @transform_4(%arg0: i32) -> (i32, i32) {
    %c0_i32 = arith.constant 0 : i32
    %c0_i32_0 = arith.constant 0 : i32
    return %arg0, %c0_i32 : i32, i32
  }
  func.func @transform_5(%arg0: i32) -> (i32, i32) {
    %c0_i32 = arith.constant 0 : i32
    %c0_i32_0 = arith.constant 0 : i32
    return %arg0, %c0_i32 : i32, i32
  }
}

</mosaic_0001>

<llo_original>
// kernel: tpu_custom_call.1
$region0: #{tpu_custom_call.1}
  #allocation0 [shape = 'u32[]', space=smem, size = 0x4, offset = 0x4, fixed_abs, tag = 'smem constant byte address 0x4 - core index']
  #allocation1 [shape = 'u32[144,128]{1,0:T(1,128)}', space=vmem, size = 0x12000, scoped, tag = 'internal scratch']
  %s0 = inlined_call_operand.vmem [shape: f32[16,32], index: 0, kind: input, shape index: {}]
  %s1 = inlined_call_operand.hbm [shape: f32[32,128], index: 1, kind: input, shape index: {}]
  %s2 = inlined_call_operand.vmem [shape: f32[1,128], index: 2, kind: input, shape index: {}]
  %s3 = inlined_call_operand.vmem [shape: s32[16,1], index: 3, kind: input, shape index: {}]
  %s4 = inlined_call_operand.hbm [shape: f32[16,128], index: 4, kind: output, shape index: {0}]
  %s5 = inlined_call_operand.vmem [shape: f32[16,1], index: 5, kind: output, shape index: {1}]
  %6 = xla_tuple %s4, %s5
  %s7 = sld [smem:[#allocation0]]
  $region61: #{tpu_custom_call.1} parent=0
    _
  %s9 = ssub.s32 1, %s7
  %s10 = scalar_select 0, %s9, %s7
  $region1: #{tpu_custom_call.1} parent=0
    #allocation2 [shape = 'u8[16384]{0}', space=vmem, size = 0x4000, scoped, tag = 'input window, operand 1, single buffered']
    #allocation3 [shape = 's32[2]{0}', space=sflag, size = 0x8, scoped, tag = 'scoped memory for tpu_custom_call.1']
    #allocation4 [shape = 's32[2]{0}', space=sflag, size = 0x8, scoped, tag = 'scoped memory for tpu_custom_call.1']
    #allocation5 [shape = 'u8[8192]{0}', space=vmem, size = 0x2000, scoped, tag = 'output window, operand 0']
    %11 = vsyncpa [#allocation3], 0
    %12 = vsyncpa [#allocation4], 0
    %s13 = scalar_lea.sflag [#allocation4], 1
    %14 = vsyncpa %s13, 0
    loop: start=0, step=1, limit=4
    $region2: #{tpu_custom_call.1} parent=1 // loop_pre_header
      _
    $region3: #{tpu_custom_call.1} parent=1 // loop_header
      %s16 = sphi 0, %s20
      %p17 = scmp.ge.s32.totalorder %s16, 4
      %s26 = sphi 0, %s28
      %s29 = sphi 0, %s26
      %s30 = sphi 0, %s29
      %s46 = sphi 0, %s30
      %s50 = sphi 0, %s50
      %s52 = sphi 0, %s50
      %s53 = sphi 0, %s52
      %s67 = sphi 0, %s53
      %s71 = sphi 0, %s71
      %s73 = sphi 0, %s71
      %s74 = sphi 0, %s73
      %s88 = sphi 0, %s74
      %s94 = sphi 0, %s96
      %s97 = sphi 0, %s94
      %s98 = sphi 0, %s97
      %s114 = sphi 0, %s98
      %s120 = sphi 0, %s122
      %s123 = sphi 0, %s120
      %s124 = sphi 0, %s123
      %s140 = sphi 0, %s124
      %s146 = sphi 0, %s148
      %s149 = sphi 0, %s146
      %s150 = sphi 0, %s149
      %s166 = sphi 0, %s150
    $region4: #{tpu_custom_call.1} parent=1 // loop_header_branch
      %19 = sbr.rel (%p17) target = $region8
    $region5: #{tpu_custom_call.1} parent=1 // loop_body
      %s21 = ssub.s32 %s16, 1
      %s22 = ssub.s32 %s16, 2
      %s23 = sadd.s32 %s16, 1
      %s24 = ssub.s32 %s16, %s23
      %p25 = scmp.eq.s32.totalorder %s24, 0
      %s27 = sadd.s32 %s26, 1
      %s28 = scalar_select %p25, %s26, %s27
      %p31 = pneg %p25
      %p32 = scmp.eq.s32.totalorder %s16, 1
      %p33 = por %p31, %p32
      %p34 = scmp.ne.s32.totalorder %s26, %s29
      %p35 = scmp.eq.s32.totalorder %s16, 0
      %p36 = por %p34, %p35
      %p37 = scmp.ne.s32.totalorder %s26, %s29
      %p38 = scmp.eq.s32.totalorder %s21, 1
      %p39 = por %p37, %p38
      %p40 = scmp.ne.s32.totalorder %s29, %s30
      %p41 = scmp.eq.s32.totalorder %s21, 0
      %p42 = por %p40, %p41
      %p43 = scmp.ne.s32.totalorder %s29, %s30
      %p44 = scmp.eq.s32.totalorder %s22, 1
      %p45 = por %p43, %p44
      %p47 = scmp.ne.s32.totalorder %s30, %s46
      %p48 = scmp.eq.s32.totalorder %s22, 0
      %p49 = por %p47, %p48
      %s51 = sadd.s32 %s50, 1
      %p54 = scmp.eq.s32.totalorder %s16, 1
      %p55 = scmp.ne.s32.totalorder %s50, %s52
      %p56 = scmp.eq.s32.totalorder %s16, 0
      %p57 = por %p55, %p56
      %p58 = scmp.ne.s32.totalorder %s50, %s52
      %p59 = scmp.eq.s32.totalorder %s21, 1
      %p60 = por %p58, %p59
      %p61 = scmp.ne.s32.totalorder %s52, %s53
      %p62 = scmp.eq.s32.totalorder %s21, 0
      %p63 = por %p61, %p62
      %p64 = scmp.ne.s32.totalorder %s52, %s53
      %p65 = scmp.eq.s32.totalorder %s22, 1
      %p66 = por %p64, %p65
      %p68 = scmp.ne.s32.totalorder %s53, %s67
      %p69 = scmp.eq.s32.totalorder %s22, 0
      %p70 = por %p68, %p69
      %s72 = sadd.s32 %s71, 1
      %p75 = scmp.eq.s32.totalorder %s16, 1
      %p76 = scmp.ne.s32.totalorder %s71, %s73
      %p77 = scmp.eq.s32.totalorder %s16, 0
      %p78 = por %p76, %p77
      %p79 = scmp.ne.s32.totalorder %s71, %s73
      %p80 = scmp.eq.s32.totalorder %s21, 1
      %p81 = por %p79, %p80
      %p82 = scmp.ne.s32.totalorder %s73, %s74
      %p83 = scmp.eq.s32.totalorder %s21, 0
      %p84 = por %p82, %p83
      %p85 = scmp.ne.s32.totalorder %s73, %s74
      %p86 = scmp.eq.s32.totalorder %s22, 1
      %p87 = por %p85, %p86
      %p89 = scmp.ne.s32.totalorder %s74, %s88
      %p90 = scmp.eq.s32.totalorder %s22, 0
      %p91 = por %p89, %p90
      %s92 = ssub.s32 %s16, %s23
      %p93 = scmp.eq.s32.totalorder %s92, 0
      %s95 = sadd.s32 %s94, 1
      %s96 = scalar_select %p93, %s94, %s95
      %p99 = pneg %p93
      %p100 = scmp.eq.s32.totalorder %s16, 1
      %p101 = por %p99, %p100
      %p102 = scmp.ne.s32.totalorder %s94, %s97
      %p103 = scmp.eq.s32.totalorder %s16, 0
      %p104 = por %p102, %p103
      %p105 = scmp.ne.s32.totalorder %s94, %s97
      %p106 = scmp.eq.s32.totalorder %s21, 1
      %p107 = por %p105, %p106
      %p108 = scmp.ne.s32.totalorder %s97, %s98
      %p109 = scmp.eq.s32.totalorder %s21, 0
      %p110 = por %p108, %p109
      %p111 = scmp.ne.s32.totalorder %s97, %s98
      %p112 = scmp.eq.s32.totalorder %s22, 1
      %p113 = por %p111, %p112
      %p115 = scmp.ne.s32.totalorder %s98, %s114
      %p116 = scmp.eq.s32.totalorder %s22, 0
      %p117 = por %p115, %p116
      %s118 = ssub.s32 %s16, %s23
      %p119 = scmp.eq.s32.totalorder %s118, 0
      %s121 = sadd.s32 %s120, 1
      %s122 = scalar_select %p119, %s120, %s121
      %p125 = pneg %p119
      %p126 = scmp.eq.s32.totalorder %s16, 1
      %p127 = por %p125, %p126
      %p128 = scmp.ne.s32.totalorder %s120, %s123
      %p129 = scmp.eq.s32.totalorder %s16, 0
      %p130 = por %p128, %p129
      %p131 = scmp.ne.s32.totalorder %s120, %s123
      %p132 = scmp.eq.s32.totalorder %s21, 1
      %p133 = por %p131, %p132
      %p134 = scmp.ne.s32.totalorder %s123, %s124
      %p135 = scmp.eq.s32.totalorder %s21, 0
      %p136 = por %p134, %p135
      %p137 = scmp.ne.s32.totalorder %s123, %s124
      %p138 = scmp.eq.s32.totalorder %s22, 1
      %p139 = por %p137, %p138
      %p141 = scmp.ne.s32.totalorder %s124, %s140
      %p142 = scmp.eq.s32.totalorder %s22, 0
      %p143 = por %p141, %p142
      %s144 = ssub.s32 %s16, %s23
      %p145 = scmp.eq.s32.totalorder %s144, 0
      %s147 = sadd.s32 %s146, 1
      %s148 = scalar_select %p145, %s146, %s147
      %p151 = pneg %p145
      %p152 = scmp.eq.s32.totalorder %s16, 1
      %p153 = por %p151, %p152
      %p154 = scmp.ne.s32.totalorder %s146, %s149
      %p155 = scmp.eq.s32.totalorder %s16, 0
      %p156 = por %p154, %p155
      %p157 = scmp.ne.s32.totalorder %s146, %s149
      %p158 = scmp.eq.s32.totalorder %s21, 1
      %p159 = por %p157, %p158
      %p160 = scmp.ne.s32.totalorder %s149, %s150
      %p161 = scmp.eq.s32.totalorder %s21, 0
      %p162 = por %p160, %p161
      %p163 = scmp.ne.s32.totalorder %s149, %s150
      %p164 = scmp.eq.s32.totalorder %s22, 1
      %p165 = por %p163, %p164
      %p167 = scmp.ne.s32.totalorder %s150, %s166
      %p168 = scmp.eq.s32.totalorder %s22, 0
      %p169 = por %p167, %p168
      %p170 = scmp.le.s32.totalorder 1, %s16
      %p171 = scmp.lt.s32.totalorder %s16, 3
      %p172 = pnand %p170, %p171
      %p173 = pneg %p172
      // Predicated region
      $region9: #{tpu_custom_call.1} parent=5 // pred_check
        _
      $region10: #{tpu_custom_call.1} parent=5 // pred_check_branch
        %175 = sbr.rel (%p172) target = $region12
      $region11: #{tpu_custom_call.1} parent=5 // pred_region
        %s176 = ssub.s32 %s16, 1
        // Predicated region
        $region13: #{tpu_custom_call.1} parent=11 // pred_check
          %p177 = pneg %p63
        $region14: #{tpu_custom_call.1} parent=11 // pred_check_branch
          %179 = sbr.rel (%p177) target = $region16
        $region15: #{tpu_custom_call.1} parent=11 // pred_region
          %s181 = ssub.s32 512, 512
          %182 = vsyncadd [#allocation3], %s181
          %s183 = sshll.u32 [#allocation2], 4
          %s184 = int_to_ptr.vmem [resolvable:$true] %s183
          %189 = dma.hbm_to_vmem [thread:$0]  %s1, 512, %s184, [#allocation3], 128, 128, 8
        $region16: #{tpu_custom_call.1} parent=11 // pred_fallthru
          _
        // Predicated region
        $region17: #{tpu_custom_call.1} parent=11 // pred_check
          %p190 = pneg %p84
        $region18: #{tpu_custom_call.1} parent=11 // pred_check_branch
          %192 = sbr.rel (%p190) target = $region20
        $region19: #{tpu_custom_call.1} parent=11 // pred_region
          _
        $region20: #{tpu_custom_call.1} parent=11 // pred_fallthru
          _
      $region12: #{tpu_custom_call.1} parent=5 // pred_fallthru
        _
      %p193 = scmp.lt.s32.totalorder %s16, 2
      // Predicated region
      $region21: #{tpu_custom_call.1} parent=5 // pred_check
        %p194 = pneg %p193
      $region22: #{tpu_custom_call.1} parent=5 // pred_check_branch
        %196 = sbr.rel (%p194) target = $region24
      $region23: #{tpu_custom_call.1} parent=5 // pred_region
        // Predicated region
        $region25: #{tpu_custom_call.1} parent=23 // pred_check
          %p197 = pneg %p36
        $region26: #{tpu_custom_call.1} parent=23 // pred_check_branch
          %199 = sbr.rel (%p197) target = $region28
        $region27: #{tpu_custom_call.1} parent=23 // pred_region
          %p200 = scmp.lt.s32.totalorder %s16, 1
          %s201 = scalar_select %p200, %s16, 1
          %s202 = smul.addr %s201, 8
          %s203 = scalar_lea.vmem %s0, %s202
        $region28: #{tpu_custom_call.1} parent=23 // pred_fallthru
          _
        // Predicated region
        $region29: #{tpu_custom_call.1} parent=23 // pred_check
          %p204 = pneg %p104
        $region30: #{tpu_custom_call.1} parent=23 // pred_check_branch
          %206 = sbr.rel (%p204) target = $region32
        $region31: #{tpu_custom_call.1} parent=23 // pred_region
          %p207 = scmp.lt.s32.totalorder %s16, 1
          %s208 = scalar_select %p207, %s16, 1
          %s209 = smul.addr %s208, 8
          %s210 = scalar_lea.vmem %s3, %s209
        $region32: #{tpu_custom_call.1} parent=23 // pred_fallthru
          _
      $region24: #{tpu_custom_call.1} parent=5 // pred_fallthru
        _
      %p211 = scmp.le.s32.totalorder 1, %s16
      %p212 = scmp.lt.s32.totalorder %s16, 3
      %p213 = pnand %p211, %p212
      %p214 = pneg %p213
      // Predicated region
      $region33: #{tpu_custom_call.1} parent=5 // pred_check
        _
      $region34: #{tpu_custom_call.1} parent=5 // pred_check_branch
        %216 = sbr.rel (%p213) target = $region36
      $region35: #{tpu_custom_call.1} parent=5 // pred_region
        %s217 = ssub.s32 %s16, 1
        // Predicated region
        $region37: #{tpu_custom_call.1} parent=35 // pred_check
          %p218 = pneg %p63
        $region38: #{tpu_custom_call.1} parent=35 // pred_check_branch
          %220 = sbr.rel (%p218) target = $region40
        $region39: #{tpu_custom_call.1} parent=35 // pred_region
          %221 = dma.done [#allocation3], 512
        $region40: #{tpu_custom_call.1} parent=35 // pred_fallthru
          _
        %p222 = scmp.lt.s32.totalorder %s21, 1
        %s223 = scalar_select %p222, %s21, 1
        %s224 = smul.addr %s223, 8
        %s225 = scalar_lea.vmem %s0, %s224
        %p226 = pneg %p42
        %p227 = pneg %p39
        %p228 = pneg %p63
        %p229 = pneg %p60
        %p230 = pneg %p84
        %p231 = pneg %p81
        %p232 = scmp.lt.s32.totalorder %s21, 1
        %s233 = scalar_select %p232, %s21, 1
        %s234 = smul.addr %s233, 8
        %s235 = scalar_lea.vmem %s3, %s234
        %p236 = pneg %p110
        %p237 = pneg %p107
        %p238 = pneg %p136
        %p239 = pneg %p133
        %s240 = sand.u32 %s123, 1
        %s241 = scalar_lea.sflag [#allocation4], %s240
        %s242 = sand.u32 %s123, 1
        %s243 = smul.addr %s242, 8
        %s244 = scalar_lea.vmem [#allocation5], %s243
        %p245 = pneg %p162
        %p246 = pneg %p159
        %p247 = scmp.lt.s32.totalorder %s21, 1
        %s248 = scalar_select %p247, %s21, 1
        %s249 = smul.addr %s248, 8
        %s250 = scalar_lea.vmem %s5, %s249
        %p251 = scmp.lt.s32.totalorder %s21, 1
        %s252 = scalar_select %p251, %s21, 1
        %s253 = smul.addr %s252, 8
        %s254 = scalar_lea.vmem %s0, %s253
        %p255 = scmp.lt.s32.totalorder %s21, 1
        %s256 = scalar_select %p255, %s21, 1
        %s257 = smul.addr %s256, 8
        %s258 = scalar_lea.vmem %s3, %s257
        %p259 = scmp.lt.s32.totalorder %s21, 1
        %s260 = scalar_select %p259, %s21, 1
        %s261 = smul.addr %s260, 8
        %s262 = scalar_lea.vmem %s5, %s261
        %v263 = vld [vmem:[%s254] sm:$0xff]
        %v264 = vld [vmem:[#allocation2] sm:$0xff]
        %v265 = vld [vmem:[#allocation2 + $0x8] sm:$0xff]
        %v266 = vld [vmem:[#allocation2 + $0x10] sm:$0xff]
        %v267 = vld [vmem:[#allocation2 + $0x18] sm:$0xff]
        %v268 = vld [vmem:[%s2] sm:$0x1]
        %v270 = vlaneseq
        %v271 = vshrl.u32 %v270, 7
        %v272 = vsub.s32 0, %v271
        %v273 = vrot.slane %v268, %v272
        %vm275 = vcmask 261120
        %v277 = vsel %vm275, %v263, 0
        %279 = vmatprep.subr.mxu0 0.0
        %280 = vmatpush1.msra.mxu0 0.0
        %281 = vmatprep.subr.mxu0 0.0
        %282 = vmatpush1.msra.mxu0 0.0
        %283 = vmatprep.subr.mxu0 0.0
        %284 = vmatpush1.msra.mxu0 0.0
        %285 = vmatprep.subr.mxu0 0.0
        %286 = vmatpush1.msra.mxu0 0.0
        %287 = vmatprep.subr.mxu0 0.0
        %288 = vmatpush1.msra.mxu0 0.0
        %289 = vmatprep.subr.mxu0 0.0
        %290 = vmatpush1.msra.mxu0 0.0
        %291 = vmatprep.subr.mxu0 0.0
        %292 = vmatpush1.msra.mxu0 0.0
        %293 = vmatprep.subr.mxu0 0.0
        %294 = vmatpush1.msra.mxu0 0.0
        %295 = vmatprep.subr.mxu0 0.0
        %296 = vmatpush1.msra.mxu0 0.0
        %297 = vmatprep.subr.mxu0 0.0
        %298 = vmatpush1.msra.mxu0 0.0
        %299 = vmatprep.subr.mxu0 0.0
        %300 = vmatpush1.msra.mxu0 0.0
        %301 = vmatprep.subr.mxu0 0.0
        %302 = vmatpush1.msra.mxu0 0.0
        %303 = vmatprep.subr.mxu0 0.0
        %304 = vmatpush1.msra.mxu0 %v267
        %305 = vmatprep.subr.mxu0 0.0
        %306 = vmatpush1.msra.mxu0 %v266
        %307 = vmatprep.subr.mxu0 0.0
        %308 = vmatpush1.msra.mxu0 %v265
        %309 = vmatprep.subr.mxu0 0.0
        %310 = vmatpush1.msra.mxu0 %v264
        %311 = vmatprep.subr.mxu0 0.0
        %312 = vmatpush2.msra.mxu0 0.0
        %313 = vmatprep.subr.mxu0 0.0
        %314 = vmatpush2.msra.mxu0 0.0
        %315 = vmatprep.subr.mxu0 0.0
        %316 = vmatpush2.msra.mxu0 0.0
        %317 = vmatprep.subr.mxu0 0.0
        %318 = vmatpush2.msra.mxu0 0.0
        %319 = vmatprep.subr.mxu0 0.0
        %320 = vmatpush2.msra.mxu0 0.0
        %321 = vmatprep.subr.mxu0 0.0
        %322 = vmatpush2.msra.mxu0 0.0
        %323 = vmatprep.subr.mxu0 0.0
        %324 = vmatpush2.msra.mxu0 0.0
        %325 = vmatprep.subr.mxu0 0.0
        %326 = vmatpush2.msra.mxu0 0.0
        %327 = vmatprep.subr.mxu0 0.0
        %328 = vmatpush2.msra.mxu0 0.0
        %329 = vmatprep.subr.mxu0 0.0
        %330 = vmatpush2.msra.mxu0 0.0
        %331 = vmatprep.subr.mxu0 0.0
        %332 = vmatpush2.msra.mxu0 0.0
        %333 = vmatprep.subr.mxu0 0.0
        %334 = vmatpush2.msra.mxu0 0.0
        %335 = vmatprep.subr.mxu0 0.0
        %336 = vmatpush2.msra.mxu0 0.0
        %337 = vmatprep.subr.mxu0 0.0
        %338 = vmatpush2.msra.mxu0 0.0
        %339 = vmatprep.subr.mxu0 0.0
        %340 = vmatpush2.msra.mxu0 0.0
        %341 = vmatprep.subr.mxu0 0.0
        %342 = vmatpush2.msra.mxu0 0.0
        %343 = vmatprep.mubr.f32.mxu0 0.0
        %344 = vmatmul.mubr.f32.gmra.mxu0 %v277
        %v345 = vpop.f32.mrf.mxu0
        %v346 = vadd.f32 %v273, %v345
        %v347 = vpop.f32.mrf.mxu0
        %348 = vdwg.mxu0
        %349 = vmax.xlane.f32.xlu0 %v346
        %v350 = vpop.xlane.xlu0 %349
        %v351 = vsub.f32 %v346, %v350
        %v352 = vmul.f32 %v351, 1.442695
        %v353 = vpow.pop %v352
        %354 = vadd.xlane.f32.xlu0 %v353
        %v355 = vpop.xlane.xlu0 %354
        %v356 = vrcp.pop %v355
        %v357 = vmul.f32 %v353, %v356
        %358 = vst [vmem:[%s244] sm:$0xff] %v357
        %v359 = vlog2.pop %v355
        %v360 = vmul.f32 %v359, 0.6931472
        %v361 = vadd.f32 %v350, %v360
        %v362 = vlaneseq
        %v363 = vand.u32 %v362, 127
        %v364 = vld [vmem:[%s258] sm:$0xff]
        %365 = vset.pattern.permute.xlu0 0
        %366 = vperm.xlu0 %365, %v364
        %v367 = vpop.permute.xlu0 %366
        %vm368 = vcmp.eq.s32.totalorder %v363, %v367
        %v369 = vsel %vm368, %v346, 0.0
        %370 = vadd.xlane.f32.xlu0 %v369
        %v371 = vpop.xlane.xlu0 %370
        %v372 = vsub.f32 %v361, %v371
        %s373 = smul.u32 %s21, 8
        %v374 = vlaneseq
        %v375 = vshrl.u32 %v374, 7
        %v376 = vstv %s373
        %v377 = vadd.s32 %v376, %v375
        %vm378 = vcmp.lt.s32.totalorder %v377, 16
        %v379 = vsel %vm378, %v372, 0.0
        %vm380 = vcmask 7168
        %381 = vst.msk [vmem:[%s262] sm:$0xff] %vm380, %v379
        %s382 = sand.u32 %s123, 1
        %s383 = scalar_lea.sflag [#allocation4], %s382
        %s384 = sand.u32 %s123, 1
        %s385 = smul.addr %s384, 8
        %s386 = scalar_lea.vmem [#allocation5], %s385
        %p387 = scmp.lt.s32.totalorder %s21, 1
        %s388 = scalar_select %p387, %s21, 1
        %s389 = smul.addr %s388, 8
        %s390 = scalar_lea.vmem %s5, %s389
        // Predicated region
        $region41: #{tpu_custom_call.1} parent=35 // pred_check
          %p391 = pneg %p133
        $region42: #{tpu_custom_call.1} parent=35 // pred_check_branch
          %393 = sbr.rel (%p391) target = $region44
        $region43: #{tpu_custom_call.1} parent=35 // pred_region
          %s395 = ssub.s32 128, 128
          %396 = vsyncadd %s383, %s395
          %s397 = smul.addr %s21, 128
          %s398 = scalar_lea.hbm %s4, %s397
          %s400 = sshll.u32 %s386, 4
          %s401 = int_to_ptr.vmem [resolvable:$true] %s400
          %403 = dma.vmem_to_hbm [thread:$0]  %s401, 128, %s398, %s383
        $region44: #{tpu_custom_call.1} parent=35 // pred_fallthru
          _
        // Predicated region
        $region45: #{tpu_custom_call.1} parent=35 // pred_check
          %p404 = pneg %p159
        $region46: #{tpu_custom_call.1} parent=35 // pred_check_branch
          %406 = sbr.rel (%p404) target = $region48
        $region47: #{tpu_custom_call.1} parent=35 // pred_region
          _
        $region48: #{tpu_custom_call.1} parent=35 // pred_fallthru
          _
      $region36: #{tpu_custom_call.1} parent=5 // pred_fallthru
        _
      %p407 = scmp.le.s32.totalorder 2, %s16
      // Predicated region
      $region49: #{tpu_custom_call.1} parent=5 // pred_check
        %p408 = pneg %p407
      $region50: #{tpu_custom_call.1} parent=5 // pred_check_branch
        %410 = sbr.rel (%p408) target = $region52
      $region51: #{tpu_custom_call.1} parent=5 // pred_region
        %s411 = ssub.s32 %s16, 2
        // Predicated region
        $region53: #{tpu_custom_call.1} parent=51 // pred_check
          %p412 = pneg %p139
        $region54: #{tpu_custom_call.1} parent=51 // pred_check_branch
          %414 = sbr.rel (%p412) target = $region56
        $region55: #{tpu_custom_call.1} parent=51 // pred_region
          %s415 = sand.u32 %s124, 1
          %s416 = scalar_lea.sflag [#allocation4], %s415
          %s417 = sand.u32 %s124, 1
          %s418 = smul.addr %s417, 8
          %s419 = scalar_lea.vmem [#allocation5], %s418
          %420 = dma.done %s416, 128
        $region56: #{tpu_custom_call.1} parent=51 // pred_fallthru
          _
        // Predicated region
        $region57: #{tpu_custom_call.1} parent=51 // pred_check
          %p421 = pneg %p165
        $region58: #{tpu_custom_call.1} parent=51 // pred_check_branch
          %423 = sbr.rel (%p421) target = $region60
        $region59: #{tpu_custom_call.1} parent=51 // pred_region
          %p424 = scmp.lt.s32.totalorder %s22, 1
          %s425 = scalar_select %p424, %s22, 1
          %s426 = smul.addr %s425, 8
          %s427 = scalar_lea.vmem %s5, %s426
        $region60: #{tpu_custom_call.1} parent=51 // pred_fallthru
          _
      $region52: #{tpu_custom_call.1} parent=5 // pred_fallthru
        _
    $region6: #{tpu_custom_call.1} parent=1 // loop_footer
      %s20 = sadd.s32 1, %s16
    $region7: #{tpu_custom_call.1} parent=1 // loop_footer_branch
      %15 = sbr.rel target = $region3
    $region8: #{tpu_custom_call.1} parent=1 // loop_exit
      _
    %428 = vsyncpa [#allocation3], 1
    %s429 = scalar_lea.sflag [#allocation3], 1
    %430 = vsyncpa %s429, 1
    %431 = vsyncpa [#allocation4], 1
    %s432 = scalar_lea.sflag [#allocation4], 1
    %433 = vsyncpa %s432, 1

</llo_original>
